<compile_context>
chip_gen: v7x
topology: tpu7x:2x2x1
jax: 0.10.0
libtpu: 0.0.40
codegen_flags: <defaults>
</compile_context>

<pallas_src>
import functools
import math

import jax
import jax.numpy as jnp
from jax import lax
from jax.experimental import pallas as pl
from jax.experimental.pallas import tpu as pltpu


def _round_up(x, m):
    return ((x + m - 1) // m) * m


def _vmem_capacity_bytes():
    """Physical per-core VMEM (128 MiB on v5e/v6e, 64 MiB on v7x); conservative fallback."""
    try:
        info = pltpu.get_tpu_info()
        for attr in ("vmem_capacity_bytes", "vmem_bytes", "vmem_size_bytes"):
            v = getattr(info, attr, None)
            if v:
                return int(v)
    except Exception:
        pass
    return 64 * 1024 * 1024  # conservative (v7x per-TensorCore)


def _tile_footprint_bytes(tm, th, Dp, Hp, io_is, mm_is):
    """Approximate VMEM footprint for one pipelined step (double-buffered I/O + scratch)."""
    acc_bytes = tm * Dp * 4 if th < Hp else 0   # accumulator only when H axis is tiled
    return int(
        2 * tm * Dp * io_is          # x row tile (double-buffered)
        + 2 * tm * Dp * io_is        # out row tile (double-buffered)
        + 2 * 3 * Dp * 4             # gamma / beta / b2 (tiny, f32)
        + 2 * Dp * th * mm_is        # w1 H-tile (double-buffered)
        + 2 * th * Dp * mm_is        # w2 H-tile (double-buffered)
        + 2 * th * 4                 # b1 H-tile
        + tm * Dp * mm_is            # cached LayerNorm(x) scratch
        + acc_bytes                  # f32 accumulator scratch
        + 2 * tm * th * 4            # GELU / hidden intermediate headroom
    )


def _choose_tiles(rows, Dp, Hp, io_is, mm_is, vmem_budget):
    """Pick (tm, th).

    Preference order:
      1) weights-resident: th == Hp (w1/w2 DMA'd once for the whole kernel),
         with the largest tm that fits (but tm >= 256 so MXU steps stay fat);
      2) streaming: largest tm first (arithmetic intensity ~ tm FLOPs per
         streamed weight byte), then largest th (>=512 keeps >=1 KiB bursts).
    """
    rows8 = max(8, _round_up(rows, 8))
    tm_cands = []
    for t in (1024, 768, 512, 384, 256, 128, 64, 32, 16, 8):
        t = min(t, rows8)
        if t not in tm_cands:
            tm_cands.append(t)

    safety = 1.15  # leave room for compiler-internal scratch / bookkeeping

    # 1) Weights fully VMEM-resident (H grid axis collapses to 1).
    resident_min_tm = min(256, rows8)
    for tm in tm_cands:
        if tm < resident_min_tm:
            break
        if _tile_footprint_bytes(tm, Hp, Dp, Hp, io_is, mm_is) * safety <= vmem_budget:
            return tm, Hp

    # 2) Streamed weights: prioritize big tm, then big th.
    th_cands = [t for t in (1024, 512, 256, 128) if t <= Hp and Hp % t == 0]
    if not th_cands:
        th_cands = [128]
    for tm in tm_cands:
        for th in th_cands:
            if _tile_footprint_bytes(tm, th, Dp, Hp, io_is, mm_is) * safety <= vmem_budget:
                return tm, th

    # Last resort: smallest tiles.
    return tm_cands[-1], th_cands[-1]


def _ffn_kernel(x_ref, gamma_ref, beta_ref, w1_ref, b1_ref, w2_ref, b2_ref,
                o_ref, xn_ref, *acc_refs, d_real, d_pad, n_h_steps):
    j = pl.program_id(1)
    acc_ref = acc_refs[0] if acc_refs else None

    # --- h-step 0: LayerNorm the row tile once, cache it (and zero the acc). ---
    @pl.when(j == 0)
    def _():
        x = x_ref[...].astype(jnp.float32)
        inv_d = 1.0 / d_real
        mu = jnp.sum(x, axis=-1, keepdims=True) * inv_d
        diff = x - mu
        if d_pad != d_real:
            # Mask padded feature lanes so they don't pollute the variance.
            mask = lax.broadcasted_iota(jnp.int32, x.shape, 1) < d_real
            diff = jnp.where(mask, diff, 0.0)
        var = jnp.sum(diff * diff, axis=-1, keepdims=True) * inv_d
        xn = diff * lax.rsqrt(var + 1e-5)
        xn = xn * gamma_ref[...].astype(jnp.float32) + beta_ref[...].astype(jnp.float32)
        xn_ref[...] = xn.astype(xn_ref.dtype)      # MXU-operand cache
        if n_h_steps > 1:
            acc_ref[...] = jnp.zeros_like(acc_ref)

    # --- Linear 1 (this H tile): [tm, Dp] @ [Dp, th] + b1   (MXU, f32 acc) ---
    h = jnp.dot(xn_ref[...], w1_ref[...], preferred_element_type=jnp.float32)
    h = h + b1_ref[...].astype(jnp.float32)

    # Exact GELU (erf formulation = PyTorch nn.GELU default), in f32.
    h = 0.5 * h * (1.0 + lax.erf(h * (1.0 / math.sqrt(2.0))))

    # --- Linear 2 partial sum: [tm, th] @ [th, Dp]   (MXU, f32 acc) ---
    partial = jnp.dot(h.astype(w2_ref.dtype), w2_ref[...],
                      preferred_element_type=jnp.float32)

    if n_h_steps == 1:
        # Weights-resident path: no accumulator round-trip at all.
        y = partial + b2_ref[...].astype(jnp.float32)
        o_ref[...] = (x_ref[...].astype(jnp.float32) + y).astype(o_ref.dtype)
    else:
        is_last = j == n_h_steps - 1

        @pl.when(jnp.logical_not(is_last))
        def _():
            acc_ref[...] += partial

        # Last h-step: fold the final partial sum straight into the output
        # (saves one tm x Dp f32 store+load of the accumulator).
        @pl.when(is_last)
        def _():
            y = acc_ref[...] + partial + b2_ref[...].astype(jnp.float32)
            o_ref[...] = (x_ref[...].astype(jnp.float32) + y).astype(o_ref.dtype)


def residual_feed_forward(x, gamma, beta, w1, b1, w2, b2, *,
                          tm=None, th=None, matmul_dtype=jnp.bfloat16):
    """x: [B, S, D]; gamma/beta: [D]; w1: [D, H]; b1: [H]; w2: [H, D]; b2: [D]."""
    B, S, D = x.shape
    H = w1.shape[1]
    rows = B * S

    # Lane-dense padding of the feature / hidden dims (multiples of 128).
    Dp = _round_up(D, 128)
    Hp = _round_up(H, 128)

    f32 = jnp.float32
    mm_is = jnp.dtype(matmul_dtype).itemsize
    io_is = jnp.dtype(x.dtype).itemsize

    # Generation-aware scoped-VMEM budget:
    #   128 MiB parts (v5e/v6e) -> ~100 MiB usable; 64 MiB parts (v7x) -> ~52 MiB.
    physical = _vmem_capacity_bytes()
    vmem_budget = max(24 * 1024 * 1024,
                      min(physical - 12 * 1024 * 1024, 100 * 1024 * 1024))

    auto_tm, auto_th = _choose_tiles(rows, Dp, Hp, io_is, mm_is, vmem_budget)
    if tm is None:
        tm = auto_tm
    tm = max(8, _round_up(min(tm, _round_up(rows, 8)), 8))
    if th is None:
        th = auto_th
    assert Hp % th == 0 and th % 128 == 0

    rows_p = _round_up(rows, tm)
    n_row_tiles = rows_p // tm
    n_h_steps = Hp // th

    x2d = x.reshape(rows, D)
    x2d = jnp.pad(x2d, ((0, rows_p - rows), (0, Dp - D)))
    gamma_p = jnp.pad(gamma.astype(f32), (0, Dp - D)).reshape(1, Dp)
    beta_p = jnp.pad(beta.astype(f32), (0, Dp - D)).reshape(1, Dp)
    w1_p = jnp.pad(w1, ((0, Dp - D), (0, Hp - H))).astype(matmul_dtype)
    b1_p = jnp.pad(b1.astype(f32), (0, Hp - H)).reshape(1, Hp)
    w2_p = jnp.pad(w2, ((0, Hp - H), (0, Dp - D))).astype(matmul_dtype)
    b2_p = jnp.pad(b2.astype(f32), (0, Dp - D)).reshape(1, Dp)

    grid = (n_row_tiles, n_h_steps)

    footprint = _tile_footprint_bytes(tm, th, Dp, Hp, io_is, mm_is)
    vmem_limit = int(min(max(vmem_budget, footprint * 1.2),
                         max(physical - 8 * 1024 * 1024, 24 * 1024 * 1024)))

    # Weights are fetched once when resident (th == Hp: constant block index),
    # otherwise re-streamed once per row tile.
    weight_fetches = 1 if th == Hp else n_row_tiles
    cost = pl.CostEstimate(
        flops=int(4 * rows_p * Dp * Hp),
        transcendentals=int(rows_p * Hp),
        bytes_accessed=int(2 * rows_p * Dp * io_is
                           + weight_fetches * (w1_p.size + w2_p.size) * mm_is
                           + (gamma_p.size + beta_p.size + b1_p.size + b2_p.size) * 4),
    )

    kernel = functools.partial(_ffn_kernel, d_real=D, d_pad=Dp, n_h_steps=n_h_steps)

    scratch_shapes = [pltpu.VMEM((tm, Dp), matmul_dtype)]   # cached LayerNorm(x)
    if n_h_steps > 1:
        scratch_shapes.append(pltpu.VMEM((tm, Dp), jnp.float32))  # Linear-2 accumulator

    out2d = pl.pallas_call(
        kernel,
        out_shape=jax.ShapeDtypeStruct((rows_p, Dp), x.dtype),
        grid_spec=pltpu.PrefetchScalarGridSpec(
            num_scalar_prefetch=0,
            grid=grid,
            in_specs=[
                pl.BlockSpec((tm, Dp), lambda i, j: (i, 0)),   # x row tile
                pl.BlockSpec((1, Dp), lambda i, j: (0, 0)),    # gamma
                pl.BlockSpec((1, Dp), lambda i, j: (0, 0)),    # beta
                pl.BlockSpec((Dp, th), lambda i, j: (0, j)),   # w1 H-tile
                pl.BlockSpec((1, th), lambda i, j: (0, j)),    # b1 H-tile
                pl.BlockSpec((th, Dp), lambda i, j: (j, 0)),   # w2 H-tile
                pl.BlockSpec((1, Dp), lambda i, j: (0, 0)),    # b2
            ],
            out_specs=pl.BlockSpec((tm, Dp), lambda i, j: (i, 0)),
            scratch_shapes=scratch_shapes,
        ),
        compiler_params=pltpu.CompilerParams(
            dimension_semantics=("parallel", "arbitrary"),
            vmem_limit_bytes=vmem_limit),
        cost_estimate=cost,
    )(x2d, gamma_p, beta_p, w1_p, b1_p, w2_p, b2_p)

    return out2d[:rows, :D].reshape(B, S, D)


def _reference(x, gamma, beta, w1, b1, w2, b2):
    xf = x.astype(jnp.float32)
    mu = jnp.mean(xf, axis=-1, keepdims=True)
    var = jnp.mean((xf - mu) ** 2, axis=-1, keepdims=True)
    xn = (xf - mu) * lax.rsqrt(var + 1e-5) * gamma + beta
    h = xn @ w1 + b1
    h = 0.5 * h * (1.0 + lax.erf(h / jnp.sqrt(2.0)))
    y = h @ w2 + b2
    return (xf + y).astype(x.dtype)


if __name__ == "__main__":
    # Small shapes implied by the module: tokens [B, S, d_model].
    B, S, D = 2, 8, 32
    expansion = 4
    H = D * expansion

    key = jax.random.PRNGKey(0)
    kx, k1, k2, k3, k4 = jax.random.split(key, 5)

    x = jax.random.normal(kx, (B, S, D), dtype=jnp.float32)

    # LayerNorm params (PyTorch init: gamma=1, beta=0).
    gamma = jnp.ones((D,), dtype=jnp.float32)
    beta = jnp.zeros((D,), dtype=jnp.float32)

    # Linear params, stored pre-transposed as [in, out] (PyTorch applies x @ W.T).
    lim1 = 1.0 / math.sqrt(D)
    w1 = jax.random.uniform(k1, (D, H), minval=-lim1, maxval=lim1, dtype=jnp.float32)
    b1 = jax.random.uniform(k2, (H,), minval=-lim1, maxval=lim1, dtype=jnp.float32)
    lim2 = 1.0 / math.sqrt(H)
    w2 = jax.random.uniform(k3, (H, D), minval=-lim2, maxval=lim2, dtype=jnp.float32)
    b2 = jax.random.uniform(k4, (D,), minval=-lim2, maxval=lim2, dtype=jnp.float32)

    ref = _reference(x, gamma, beta, w1, b1, w2, b2)

    # 1) f32-MXU path: validates the math exactly against the reference.
    out_f32 = residual_feed_forward(x, gamma, beta, w1, b1, w2, b2,
                                    matmul_dtype=jnp.float32)
    out_f32 = jax.block_until_ready(out_f32)
    assert out_f32.shape == (B, S, D)
    assert jnp.allclose(out_f32, ref, atol=1e-5, rtol=1e-5), "f32 mismatch vs reference"

    # 2) Default perf config (bf16 MXU operands, f32 accumulation).
    out = residual_feed_forward(x, gamma, beta, w1, b1, w2, b2)
    out = jax.block_until_ready(out)
    assert out.shape == (B, S, D)
    assert jnp.allclose(out, ref, atol=3e-2, rtol=3e-2), "bf16 mismatch vs reference"

    # 3) Exercise the streamed-weights path (H axis tiled) for coverage.
    out_stream = residual_feed_forward(x, gamma, beta, w1, b1, w2, b2,
                                       th=128, matmul_dtype=jnp.float32)
    out_stream = jax.block_until_ready(out_stream)
    assert jnp.allclose(out_stream, ref, atol=1e-5, rtol=1e-5), "streamed-path mismatch"

    print("KERNEL_OK")
</pallas_src>

<mosaic_0001>
module attributes {stable_mosaic.version = 11 : i64} {
  func.func @_ffn_kernel(%arg0: i32, %arg1: i32, %arg2: memref<16x128xf32, #tpu.memory_space<vmem>>, %arg3: memref<1x128xf32, #tpu.memory_space<vmem>>, %arg4: memref<1x128xf32, #tpu.memory_space<vmem>>, %arg5: memref<128x128xf32, #tpu.memory_space<vmem>>, %arg6: memref<1x128xf32, #tpu.memory_space<vmem>>, %arg7: memref<128x128xf32, #tpu.memory_space<vmem>>, %arg8: memref<1x128xf32, #tpu.memory_space<vmem>>, %arg9: memref<16x128xf32, #tpu.memory_space<vmem>>, %arg10: memref<16x128xf32, #tpu.memory_space<vmem>>) attributes {dimension_semantics = [#tpu.dimension_semantics<parallel>, #tpu.dimension_semantics<arbitrary>], iteration_bounds = array<i64: 1, 1>, scalar_prefetch = 0 : i64, scratch_operands = 1 : i64, tpu.core_type = #tpu.core_type<tc>, window_params = [{transform_indices = @transform_0, window_bounds = array<i64: 16, 128>}, {pipeline_mode = #tpu.pipeline_mode<synchronous>, transform_indices = @transform_1, window_bounds = array<i64: 1, 128>}, {pipeline_mode = #tpu.pipeline_mode<synchronous>, transform_indices = @transform_2, window_bounds = array<i64: 1, 128>}, {transform_indices = @transform_3, window_bounds = array<i64: 128, 128>}, {transform_indices = @transform_4, window_bounds = array<i64: 1, 128>}, {transform_indices = @transform_5, window_bounds = array<i64: 128, 128>}, {pipeline_mode = #tpu.pipeline_mode<synchronous>, transform_indices = @transform_6, window_bounds = array<i64: 1, 128>}, {transform_indices = @transform_7, window_bounds = array<i64: 16, 128>}]} {
    %c0_i32 = arith.constant 0 : i32
    %0 = arith.cmpi eq, %arg1, %c0_i32 : i32
    %1 = arith.extui %0 : i1 to i32
    %c0_i32_0 = arith.constant 0 : i32
    %2 = arith.cmpi ne, %1, %c0_i32_0 : i32
    scf.if %2 {
      %c0_18 = arith.constant 0 : index
      %c0_19 = arith.constant 0 : index
      %25 = vector.load %arg2[%c0_18, %c0_19] : memref<16x128xf32, #tpu.memory_space<vmem>>, vector<16x128xf32>
      %cst_20 = arith.constant dense<0.000000e+00> : vector<16xf32>
      %26 = vector.multi_reduction <add>, %25, %cst_20 [1] : vector<16x128xf32> to vector<16xf32>
      %27 = vector.shape_cast %26 : vector<16xf32> to vector<16x1xf32>
      %cst_21 = arith.constant 3.125000e-02 : f32
      %28 = vector.broadcast %cst_21 : f32 to vector<16x1xf32>
      %29 = arith.mulf %27, %28 : vector<16x1xf32>
      %30 = vector.broadcast %29 : vector<16x1xf32> to vector<16x128xf32>
      %31 = arith.subf %25, %30 : vector<16x128xf32>
      %32 = tpu.iota {dimensions = array<i32: 1>} : vector<16x128xi32>
      %c32_i32 = arith.constant 32 : i32
      %33 = vector.broadcast %c32_i32 : i32 to vector<16x128xi32>
      %34 = arith.cmpi slt, %32, %33 : vector<16x128xi32>
      %cst_22 = arith.constant 0.000000e+00 : f32
      %35 = vector.broadcast %cst_22 : f32 to vector<16x128xf32>
      %36 = arith.select %34, %31, %35 : vector<16x128xi1>, vector<16x128xf32>
      %37 = arith.mulf %36, %36 : vector<16x128xf32>
      %cst_23 = arith.constant dense<0.000000e+00> : vector<16xf32>
      %38 = vector.multi_reduction <add>, %37, %cst_23 [1] : vector<16x128xf32> to vector<16xf32>
      %39 = vector.shape_cast %38 : vector<16xf32> to vector<16x1xf32>
      %cst_24 = arith.constant 3.125000e-02 : f32
      %40 = vector.broadcast %cst_24 : f32 to vector<16x1xf32>
      %41 = arith.mulf %39, %40 : vector<16x1xf32>
      %cst_25 = arith.constant 9.99999974E-6 : f32
      %42 = vector.broadcast %cst_25 : f32 to vector<16x1xf32>
      %43 = arith.addf %41, %42 : vector<16x1xf32>
      %44 = math.rsqrt %43 : vector<16x1xf32>
      %45 = vector.broadcast %44 : vector<16x1xf32> to vector<16x128xf32>
      %46 = arith.mulf %36, %45 : vector<16x128xf32>
      %c0_26 = arith.constant 0 : index
      %c0_27 = arith.constant 0 : index
      %47 = vector.load %arg3[%c0_26, %c0_27] : memref<1x128xf32, #tpu.memory_space<vmem>>, vector<1x128xf32>
      %48 = vector.broadcast %47 : vector<1x128xf32> to vector<16x128xf32>
      %49 = arith.mulf %46, %48 : vector<16x128xf32>
      %c0_28 = arith.constant 0 : index
      %c0_29 = arith.constant 0 : index
      %50 = vector.load %arg4[%c0_28, %c0_29] : memref<1x128xf32, #tpu.memory_space<vmem>>, vector<1x128xf32>
      %51 = vector.broadcast %50 : vector<1x128xf32> to vector<16x128xf32>
      %52 = arith.addf %49, %51 : vector<16x128xf32>
      %c0_30 = arith.constant 0 : index
      %c0_31 = arith.constant 0 : index
      %53 = vector.load %arg10[%c0_30, %c0_31] : memref<16x128xf32, #tpu.memory_space<vmem>>, vector<16x128xf32>
      tpu.vector_store %arg10[%c0_30, %c0_31], %52 {strides = array<i32>} : memref<16x128xf32, #tpu.memory_space<vmem>>, vector<16x128xf32>,
    } else {
    }
    %c0 = arith.constant 0 : index
    %c0_1 = arith.constant 0 : index
    %3 = vector.load %arg10[%c0, %c0_1] : memref<16x128xf32, #tpu.memory_space<vmem>>, vector<16x128xf32>
    %c0_2 = arith.constant 0 : index
    %c0_3 = arith.constant 0 : index
    %4 = vector.load %arg5[%c0_2, %c0_3] : memref<128x128xf32, #tpu.memory_space<vmem>>, vector<128x128xf32>
    %cst = arith.constant dense<0.000000e+00> : vector<16x128xf32>
    %5 = tpu.matmul %3, %4, %cst {dimension_numbers = #tpu.dot_dimension_numbers<[1], [0], [0], [1], [0, 0, 1, 1], [], []>} : vector<16x128xf32>, vector<128x128xf32>, vector<16x128xf32> -> vector<16x128xf32>
    %c0_4 = arith.constant 0 : index
    %c0_5 = arith.constant 0 : index
    %6 = vector.load %arg6[%c0_4, %c0_5] : memref<1x128xf32, #tpu.memory_space<vmem>>, vector<1x128xf32>
    %7 = vector.broadcast %6 : vector<1x128xf32> to vector<16x128xf32>
    %8 = arith.addf %5, %7 : vector<16x128xf32>
    %cst_6 = arith.constant 5.000000e-01 : f32
    %9 = vector.broadcast %cst_6 : f32 to vector<16x128xf32>
    %10 = arith.mulf %9, %8 : vector<16x128xf32>
    %cst_7 = arith.constant 0.707106769 : f32
    %11 = vector.broadcast %cst_7 : f32 to vector<16x128xf32>
    %12 = arith.mulf %8, %11 : vector<16x128xf32>
    %13 = math.erf %12 : vector<16x128xf32>
    %cst_8 = arith.constant 1.000000e+00 : f32
    %14 = vector.broadcast %cst_8 : f32 to vector<16x128xf32>
    %15 = arith.addf %14, %13 : vector<16x128xf32>
    %16 = arith.mulf %10, %15 : vector<16x128xf32>
    %c0_9 = arith.constant 0 : index
    %c0_10 = arith.constant 0 : index
    %17 = vector.load %arg7[%c0_9, %c0_10] : memref<128x128xf32, #tpu.memory_space<vmem>>, vector<128x128xf32>
    %cst_11 = arith.constant dense<0.000000e+00> : vector<16x128xf32>
    %18 = tpu.matmul %16, %17, %cst_11 {dimension_numbers = #tpu.dot_dimension_numbers<[1], [0], [0], [1], [0, 0, 1, 1], [], []>} : vector<16x128xf32>, vector<128x128xf32>, vector<16x128xf32> -> vector<16x128xf32>
    %c0_12 = arith.constant 0 : index
    %c0_13 = arith.constant 0 : index
    %19 = vector.load %arg8[%c0_12, %c0_13] : memref<1x128xf32, #tpu.memory_space<vmem>>, vector<1x128xf32>
    %20 = vector.broadcast %19 : vector<1x128xf32> to vector<16x128xf32>
    %21 = arith.addf %18, %20 : vector<16x128xf32>
    %c0_14 = arith.constant 0 : index
    %c0_15 = arith.constant 0 : index
    %22 = vector.load %arg2[%c0_14, %c0_15] : memref<16x128xf32, #tpu.memory_space<vmem>>, vector<16x128xf32>
    %23 = arith.addf %22, %21 : vector<16x128xf32>
    %c0_16 = arith.constant 0 : index
    %c0_17 = arith.constant 0 : index
    %24 = vector.load %arg9[%c0_16, %c0_17] : memref<16x128xf32, #tpu.memory_space<vmem>>, vector<16x128xf32>
    tpu.vector_store %arg9[%c0_16, %c0_17], %23 {strides = array<i32>} : memref<16x128xf32, #tpu.memory_space<vmem>>, vector<16x128xf32>,
    return
  }
  func.func @transform_0(%arg0: i32, %arg1: i32) -> (i32, i32) {
    %c0_i32 = arith.constant 0 : i32
    %c0_i32_0 = arith.constant 0 : i32
    return %arg0, %c0_i32 : i32, i32
  }
  func.func @transform_1(%arg0: i32, %arg1: i32) -> (i32, i32) {
    %c0_i32 = arith.constant 0 : i32
    %c0_i32_0 = arith.constant 0 : i32
    %c0_i32_1 = arith.constant 0 : i32
    return %c0_i32, %c0_i32_0 : i32, i32
  }
  func.func @transform_2(%arg0: i32, %arg1: i32) -> (i32, i32) {
    %c0_i32 = arith.constant 0 : i32
    %c0_i32_0 = arith.constant 0 : i32
    %c0_i32_1 = arith.constant 0 : i32
    return %c0_i32, %c0_i32_0 : i32, i32
  }
  func.func @transform_3(%arg0: i32, %arg1: i32) -> (i32, i32) {
    %c0_i32 = arith.constant 0 : i32
    %c0_i32_0 = arith.constant 0 : i32
    return %c0_i32, %arg1 : i32, i32
  }
  func.func @transform_4(%arg0: i32, %arg1: i32) -> (i32, i32) {
    %c0_i32 = arith.constant 0 : i32
    %c0_i32_0 = arith.constant 0 : i32
    return %c0_i32, %arg1 : i32, i32
  }
  func.func @transform_5(%arg0: i32, %arg1: i32) -> (i32, i32) {
    %c0_i32 = arith.constant 0 : i32
    %c0_i32_0 = arith.constant 0 : i32
    return %arg1, %c0_i32 : i32, i32
  }
  func.func @transform_6(%arg0: i32, %arg1: i32) -> (i32, i32) {
    %c0_i32 = arith.constant 0 : i32
    %c0_i32_0 = arith.constant 0 : i32
    %c0_i32_1 = arith.constant 0 : i32
    return %c0_i32, %c0_i32_0 : i32, i32
  }
  func.func @transform_7(%arg0: i32, %arg1: i32) -> (i32, i32) {
    %c0_i32 = arith.constant 0 : i32
    %c0_i32_0 = arith.constant 0 : i32
    return %arg0, %c0_i32 : i32, i32
  }
}

</mosaic_0001>

<llo_original>
// kernel: tpu_custom_call.1
$region0: #{tpu_custom_call.1}
  #allocation0 [shape = 'u32[]', space=smem, size = 0x4, offset = 0x4, fixed_abs, tag = 'smem constant byte address 0x4 - core index']
  #allocation1 [shape = 'u32[144,128]{1,0:T(1,128)}', space=vmem, size = 0x12000, scoped, tag = 'internal scratch']
  #allocation2 [shape = 'f32[16,128]{1,0:T(8,128)}', space=vmem, size = 0x2000, scoped, tag = 'scratch operand']
  %s0 = inlined_call_operand.hbm [shape: f32[16,128], index: 0, kind: input, shape index: {}]
  %s1 = inlined_call_operand.vmem [shape: f32[1,128], index: 1, kind: input, shape index: {}]
  %s2 = inlined_call_operand.vmem [shape: f32[1,128], index: 2, kind: input, shape index: {}]
  %s3 = inlined_call_operand.hbm [shape: f32[128,128], index: 3, kind: input, shape index: {}]
  %s4 = inlined_call_operand.vmem [shape: f32[1,128], index: 4, kind: input, shape index: {}]
  %s5 = inlined_call_operand.hbm [shape: f32[128,128], index: 5, kind: input, shape index: {}]
  %s6 = inlined_call_operand.vmem [shape: f32[1,128], index: 6, kind: input, shape index: {}]
  %s7 = inlined_call_operand.hbm [shape: f32[16,128], index: 7, kind: output, shape index: {}]
  %s8 = sld [smem:[#allocation0]]
  $region54: #{tpu_custom_call.1} parent=0
    _
  %s10 = ssub.s32 1, %s8
  %s11 = scalar_select 0, %s10, %s8
  $region1: #{tpu_custom_call.1} parent=0
    #allocation3 [shape = 'u8[8192]{0}', space=vmem, size = 0x2000, scoped, tag = 'input window, operand 0, single buffered']
    #allocation4 [shape = 's32[1]{0}', space=sflag, size = 0x4, scoped, tag = 'scoped memory for tpu_custom_call.1']
    #allocation5 [shape = 's32[1]{0}', space=sflag, size = 0x4, scoped, tag = 'scoped memory for tpu_custom_call.1']
    #allocation6 [shape = 'u8[65536]{0}', space=vmem, size = 0x10000, scoped, tag = 'input window, operand 3, single buffered']
    #allocation7 [shape = 's32[1]{0}', space=sflag, size = 0x4, scoped, tag = 'scoped memory for tpu_custom_call.1']
    #allocation8 [shape = 'u8[65536]{0}', space=vmem, size = 0x10000, scoped, tag = 'input window, operand 5, single buffered']
    #allocation9 [shape = 'u8[8192]{0}', space=vmem, size = 0x2000, scoped, tag = 'output window, operand 0, single buffered']
    %12 = vsyncpa [#allocation4], 0
    %13 = vsyncpa [#allocation7], 0
    %14 = vsyncpa [#allocation5], 0
    // Predicated region
    $region2: #{tpu_custom_call.1} parent=1 // pred_check
      _
    $region3: #{tpu_custom_call.1} parent=1 // pred_check_branch
      %16 = sbr.rel (0) target = $region5
    $region4: #{tpu_custom_call.1} parent=1 // pred_region
      %s18 = ssub.s32 256, 256
      %19 = vsyncadd [#allocation4], %s18
      %s20 = sshll.u32 [#allocation3], 4
      %s21 = int_to_ptr.vmem [resolvable:$true] %s20
      %26 = dma.hbm_to_vmem [thread:$0]  %s0, 256, %s21, [#allocation4], 128, 128, 8
    $region5: #{tpu_custom_call.1} parent=1 // pred_fallthru
      _
    // Predicated region
    $region6: #{tpu_custom_call.1} parent=1 // pred_check
      _
    $region7: #{tpu_custom_call.1} parent=1 // pred_check_branch
      %28 = sbr.rel (0) target = $region9
    $region8: #{tpu_custom_call.1} parent=1 // pred_region
      _
    $region9: #{tpu_custom_call.1} parent=1 // pred_fallthru
      _
    // Predicated region
    $region10: #{tpu_custom_call.1} parent=1 // pred_check
      _
    $region11: #{tpu_custom_call.1} parent=1 // pred_check_branch
      %30 = sbr.rel (0) target = $region13
    $region12: #{tpu_custom_call.1} parent=1 // pred_region
      _
    $region13: #{tpu_custom_call.1} parent=1 // pred_fallthru
      _
    // Predicated region
    $region14: #{tpu_custom_call.1} parent=1 // pred_check
      _
    $region15: #{tpu_custom_call.1} parent=1 // pred_check_branch
      %32 = sbr.rel (0) target = $region17
    $region16: #{tpu_custom_call.1} parent=1 // pred_region
      %s34 = ssub.s32 2048, 2048
      %35 = vsyncadd [#allocation7], %s34
      %s36 = sshll.u32 [#allocation6], 4
      %s37 = int_to_ptr.vmem [resolvable:$true] %s36
      %42 = dma.hbm_to_vmem [thread:$0]  %s3, 2048, %s37, [#allocation7], 128, 128, 8
    $region17: #{tpu_custom_call.1} parent=1 // pred_fallthru
      _
    // Predicated region
    $region18: #{tpu_custom_call.1} parent=1 // pred_check
      _
    $region19: #{tpu_custom_call.1} parent=1 // pred_check_branch
      %44 = sbr.rel (0) target = $region21
    $region20: #{tpu_custom_call.1} parent=1 // pred_region
      _
    $region21: #{tpu_custom_call.1} parent=1 // pred_fallthru
      _
    // Predicated region
    $region22: #{tpu_custom_call.1} parent=1 // pred_check
      _
    $region23: #{tpu_custom_call.1} parent=1 // pred_check_branch
      %46 = sbr.rel (0) target = $region25
    $region24: #{tpu_custom_call.1} parent=1 // pred_region
      %s48 = ssub.s32 2048, 2048
      %49 = vsyncadd [#allocation7], %s48
      %s50 = sshll.u32 [#allocation8], 4
      %s51 = int_to_ptr.vmem [resolvable:$true] %s50
      %56 = dma.hbm_to_vmem [thread:$0]  %s5, 2048, %s51, [#allocation7], 128, 128, 8
    $region25: #{tpu_custom_call.1} parent=1 // pred_fallthru
      _
    // Predicated region
    $region26: #{tpu_custom_call.1} parent=1 // pred_check
      _
    $region27: #{tpu_custom_call.1} parent=1 // pred_check_branch
      %58 = sbr.rel (0) target = $region29
    $region28: #{tpu_custom_call.1} parent=1 // pred_region
      _
    $region29: #{tpu_custom_call.1} parent=1 // pred_fallthru
      _
    // Predicated region
    $region30: #{tpu_custom_call.1} parent=1 // pred_check
      _
    $region31: #{tpu_custom_call.1} parent=1 // pred_check_branch
      %60 = sbr.rel (0) target = $region33
    $region32: #{tpu_custom_call.1} parent=1 // pred_region
      %61 = dma.done [#allocation4], 256
    $region33: #{tpu_custom_call.1} parent=1 // pred_fallthru
      _
    // Predicated region
    $region34: #{tpu_custom_call.1} parent=1 // pred_check
      _
    $region35: #{tpu_custom_call.1} parent=1 // pred_check_branch
      %63 = sbr.rel (0) target = $region37
    $region36: #{tpu_custom_call.1} parent=1 // pred_region
      %64 = dma.done [#allocation7], 2048
    $region37: #{tpu_custom_call.1} parent=1 // pred_fallthru
      _
    // Predicated region
    $region38: #{tpu_custom_call.1} parent=1 // pred_check
      _
    $region39: #{tpu_custom_call.1} parent=1 // pred_check_branch
      %66 = sbr.rel (0) target = $region41
    $region40: #{tpu_custom_call.1} parent=1 // pred_region
      %67 = dma.done [#allocation7], 2048
    $region41: #{tpu_custom_call.1} parent=1 // pred_fallthru
      _
    %p68 = scmp.eq.s32.totalorder 0, 0
    // Predicated region
    $region42: #{tpu_custom_call.1} parent=1 // pred_check
      %p69 = pneg %p68
    $region43: #{tpu_custom_call.1} parent=1 // pred_check_branch
      %71 = sbr.rel (%p69) target = $region45
    $region44: #{tpu_custom_call.1} parent=1 // pred_region
      %v72 = vld [vmem:[#allocation3] sm:$0xff]
      %v73 = vld [vmem:[#allocation3 + $0x8] sm:$0xff]
      %74 = vadd.xlane.f32.xlu0 %v72
      %v75 = vpop.xlane.xlu0 %74
      %76 = vadd.xlane.f32.xlu0 %v73
      %v77 = vpop.xlane.xlu0 %76
      %v78 = vmul.f32 %v75, 0.03125
      %v79 = vmul.f32 %v77, 0.03125
      %v80 = vsub.f32 %v72, %v78
      %v81 = vsub.f32 %v73, %v79
      %v82 = vlaneseq
      %v83 = vand.u32 %v82, 127
      %vm84 = vcmp.lt.s32.totalorder %v83, 32
      %v85 = vsel %vm84, %v80, 0.0
      %v86 = vsel %vm84, %v81, 0.0
      %v87 = vmul.f32 %v85, %v85
      %v88 = vmul.f32 %v86, %v86
      %89 = vadd.xlane.f32.xlu0 %v87
      %v90 = vpop.xlane.xlu0 %89
      %91 = vadd.xlane.f32.xlu0 %v88
      %v92 = vpop.xlane.xlu0 %91
      %v93 = vmul.f32 %v90, 0.03125
      %v94 = vmul.f32 %v92, 0.03125
      %v95 = vadd.f32 %v93, 1e-05
      %v96 = vadd.f32 %v94, 1e-05
      %v97 = vrsqrt.pop %v95
      %v98 = vrsqrt.pop %v96
      %v99 = vmul.f32 %v85, %v97
      %v100 = vmul.f32 %v86, %v98
      %v101 = vld [vmem:[%s1] sm:$0x1]
      %v103 = vlaneseq
      %v104 = vshrl.u32 %v103, 7
      %v105 = vsub.s32 0, %v104
      %v106 = vrot.slane %v101, %v105
      %v108 = vmul.f32 %v99, %v106
      %v109 = vmul.f32 %v100, %v106
      %v110 = vld [vmem:[%s2] sm:$0x1]
      %v112 = vlaneseq
      %v113 = vshrl.u32 %v112, 7
      %v114 = vsub.s32 0, %v113
      %v115 = vrot.slane %v110, %v114
      %v117 = vadd.f32 %v108, %v115
      %v118 = vadd.f32 %v109, %v115
      %119 = vst [vmem:[#allocation2] sm:$0xff] %v117
      %120 = vst [vmem:[#allocation2 + $0x8] sm:$0xff] %v118
    $region45: #{tpu_custom_call.1} parent=1 // pred_fallthru
      _
    %v121 = vld [vmem:[#allocation2] sm:$0xff]
    %v122 = vld [vmem:[#allocation2 + $0x8] sm:$0xff]
    %v123 = vld [vmem:[#allocation6] sm:$0xff]
    %v124 = vld [vmem:[#allocation6 + $0x8] sm:$0xff]
    %v125 = vld [vmem:[#allocation6 + $0x10] sm:$0xff]
    %v126 = vld [vmem:[#allocation6 + $0x18] sm:$0xff]
    %v127 = vld [vmem:[#allocation6 + $0x20] sm:$0xff]
    %v128 = vld [vmem:[#allocation6 + $0x28] sm:$0xff]
    %v129 = vld [vmem:[#allocation6 + $0x30] sm:$0xff]
    %v130 = vld [vmem:[#allocation6 + $0x38] sm:$0xff]
    %v131 = vld [vmem:[#allocation6 + $0x40] sm:$0xff]
    %v132 = vld [vmem:[#allocation6 + $0x48] sm:$0xff]
    %v133 = vld [vmem:[#allocation6 + $0x50] sm:$0xff]
    %v134 = vld [vmem:[#allocation6 + $0x58] sm:$0xff]
    %v135 = vld [vmem:[#allocation6 + $0x60] sm:$0xff]
    %v136 = vld [vmem:[#allocation6 + $0x68] sm:$0xff]
    %v137 = vld [vmem:[#allocation6 + $0x70] sm:$0xff]
    %v138 = vld [vmem:[#allocation6 + $0x78] sm:$0xff]
    %v139 = vld [vmem:[%s4] sm:$0x1]
    %v141 = vlaneseq
    %v142 = vshrl.u32 %v141, 7
    %v143 = vsub.s32 0, %v142
    %v144 = vrot.slane %v139, %v143
    %146 = vmatprep.subr.mxu0 0.0
    %147 = vmatpush1.msra.mxu0 %v123
    %148 = vmatprep.subr.mxu0 0.0
    %149 = vmatpush1.msra.mxu0 %v124
    %150 = vmatprep.subr.mxu0 0.0
    %151 = vmatpush1.msra.mxu0 %v125
    %152 = vmatprep.subr.mxu0 0.0
    %153 = vmatpush1.msra.mxu0 %v126
    %154 = vmatprep.subr.mxu0 0.0
    %155 = vmatpush1.msra.mxu0 %v127
    %156 = vmatprep.subr.mxu0 0.0
    %157 = vmatpush1.msra.mxu0 %v128
    %158 = vmatprep.subr.mxu0 0.0
    %159 = vmatpush1.msra.mxu0 %v129
    %160 = vmatprep.subr.mxu0 0.0
    %161 = vmatpush1.msra.mxu0 %v130
    %162 = vmatprep.subr.mxu0 0.0
    %163 = vmatpush1.msra.mxu0 %v131
    %164 = vmatprep.subr.mxu0 0.0
    %165 = vmatpush1.msra.mxu0 %v132
    %166 = vmatprep.subr.mxu0 0.0
    %167 = vmatpush1.msra.mxu0 %v133
    %168 = vmatprep.subr.mxu0 0.0
    %169 = vmatpush1.msra.mxu0 %v134
    %170 = vmatprep.subr.mxu0 0.0
    %171 = vmatpush1.msra.mxu0 %v135
    %172 = vmatprep.subr.mxu0 0.0
    %173 = vmatpush1.msra.mxu0 %v136
    %174 = vmatprep.subr.mxu0 0.0
    %175 = vmatpush1.msra.mxu0 %v137
    %176 = vmatprep.subr.mxu0 0.0
    %177 = vmatpush1.msra.mxu0 %v138
    %178 = vmatprep.subr.mxu0 0.0
    %179 = vmatpush1.msra.mxu0 0.0
    %180 = vmatprep.subr.mxu0 0.0
    %181 = vmatpush1.msra.mxu0 0.0
    %182 = vmatprep.subr.mxu0 0.0
    %183 = vmatpush1.msra.mxu0 0.0
    %184 = vmatprep.subr.mxu0 0.0
    %185 = vmatpush1.msra.mxu0 0.0
    %186 = vmatprep.subr.mxu0 0.0
    %187 = vmatpush1.msra.mxu0 0.0
    %188 = vmatprep.subr.mxu0 0.0
    %189 = vmatpush1.msra.mxu0 0.0
    %190 = vmatprep.subr.mxu0 0.0
    %191 = vmatpush1.msra.mxu0 0.0
    %192 = vmatprep.subr.mxu0 0.0
    %193 = vmatpush1.msra.mxu0 0.0
    %194 = vmatprep.subr.mxu0 0.0
    %195 = vmatpush1.msra.mxu0 0.0
    %196 = vmatprep.subr.mxu0 0.0
    %197 = vmatpush1.msra.mxu0 0.0
    %198 = vmatprep.subr.mxu0 0.0
    %199 = vmatpush1.msra.mxu0 0.0
    %200 = vmatprep.subr.mxu0 0.0
    %201 = vmatpush1.msra.mxu0 0.0
    %202 = vmatprep.subr.mxu0 0.0
    %203 = vmatpush1.msra.mxu0 0.0
    %204 = vmatprep.subr.mxu0 0.0
    %205 = vmatpush1.msra.mxu0 0.0
    %206 = vmatprep.subr.mxu0 0.0
    %207 = vmatpush1.msra.mxu0 0.0
    %208 = vmatprep.subr.mxu0 0.0
    %209 = vmatpush1.msra.mxu0 0.0
    %210 = vmatprep.mubr.f32.mxu0 0.0
    %211 = vmatmul.mubr.f32.gmra.mrb[0].mxu0 %v121
    %v212 = vpop.f32.mrb[0].mxu0
    %v213 = vadd.f32 %v144, %v212
    %v214 = vpop.f32.mrb[0].mxu0
    %215 = vmatprep.mubr.f32.mxu0 0.0
    %216 = vmatmul.mubr.f32.gmra.mrb[0].mxu0 %v122
    %v217 = vpop.f32.mrb[0].mxu0
    %v218 = vadd.f32 %v144, %v217
    %v219 = vpop.f32.mrb[0].mxu0
    %220 = vdwg.mxu0
    %v221 = vmul.f32 %v213, 0.5
    %v222 = vmul.f32 %v218, 0.5
    %v223 = vmul.f32 %v213, 0.70710677
    %v224 = vmul.f32 %v218, 0.70710677
    %v225 = verf.f32.pop %v223
    %v226 = verf.f32.pop %v224
    %v227 = vadd.f32 %v225, 1.0
    %v228 = vadd.f32 %v226, 1.0
    %v229 = vmul.f32 %v221, %v227
    %v230 = vmul.f32 %v222, %v228
    %v231 = vld [vmem:[#allocation8] sm:$0xff]
    %v232 = vld [vmem:[#allocation8 + $0x8] sm:$0xff]
    %v233 = vld [vmem:[#allocation8 + $0x10] sm:$0xff]
    %v234 = vld [vmem:[#allocation8 + $0x18] sm:$0xff]
    %v235 = vld [vmem:[#allocation8 + $0x20] sm:$0xff]
    %v236 = vld [vmem:[#allocation8 + $0x28] sm:$0xff]
    %v237 = vld [vmem:[#allocation8 + $0x30] sm:$0xff]
    %v238 = vld [vmem:[#allocation8 + $0x38] sm:$0xff]
    %v239 = vld [vmem:[#allocation8 + $0x40] sm:$0xff]
    %v240 = vld [vmem:[#allocation8 + $0x48] sm:$0xff]
    %v241 = vld [vmem:[#allocation8 + $0x50] sm:$0xff]
    %v242 = vld [vmem:[#allocation8 + $0x58] sm:$0xff]
    %v243 = vld [vmem:[#allocation8 + $0x60] sm:$0xff]
    %v244 = vld [vmem:[#allocation8 + $0x68] sm:$0xff]
    %v245 = vld [vmem:[#allocation8 + $0x70] sm:$0xff]
    %v246 = vld [vmem:[#allocation8 + $0x78] sm:$0xff]
    %v247 = vld [vmem:[%s6] sm:$0x1]
    %v249 = vlaneseq
    %v250 = vshrl.u32 %v249, 7
    %v251 = vsub.s32 0, %v250
    %v252 = vrot.slane %v247, %v251
    %254 = vmatprep.subr.mxu0 0.0
    %255 = vmatpush1.msra.mxu0 %v231
    %256 = vmatprep.subr.mxu0 0.0
    %257 = vmatpush1.msra.mxu0 %v232
    %258 = vmatprep.subr.mxu0 0.0
    %259 = vmatpush1.msra.mxu0 %v233
    %260 = vmatprep.subr.mxu0 0.0
    %261 = vmatpush1.msra.mxu0 %v234
    %262 = vmatprep.subr.mxu0 0.0
    %263 = vmatpush1.msra.mxu0 %v235
    %264 = vmatprep.subr.mxu0 0.0
    %265 = vmatpush1.msra.mxu0 %v236
    %266 = vmatprep.subr.mxu0 0.0
    %267 = vmatpush1.msra.mxu0 %v237
    %268 = vmatprep.subr.mxu0 0.0
    %269 = vmatpush1.msra.mxu0 %v238
    %270 = vmatprep.subr.mxu0 0.0
    %271 = vmatpush1.msra.mxu0 %v239
    %272 = vmatprep.subr.mxu0 0.0
    %273 = vmatpush1.msra.mxu0 %v240
    %274 = vmatprep.subr.mxu0 0.0
    %275 = vmatpush1.msra.mxu0 %v241
    %276 = vmatprep.subr.mxu0 0.0
    %277 = vmatpush1.msra.mxu0 %v242
    %278 = vmatprep.subr.mxu0 0.0
    %279 = vmatpush1.msra.mxu0 %v243
    %280 = vmatprep.subr.mxu0 0.0
    %281 = vmatpush1.msra.mxu0 %v244
    %282 = vmatprep.subr.mxu0 0.0
    %283 = vmatpush1.msra.mxu0 %v245
    %284 = vmatprep.subr.mxu0 0.0
    %285 = vmatpush1.msra.mxu0 %v246
    %286 = vmatprep.subr.mxu0 0.0
    %287 = vmatpush1.msra.mxu0 0.0
    %288 = vmatprep.subr.mxu0 0.0
    %289 = vmatpush1.msra.mxu0 0.0
    %290 = vmatprep.subr.mxu0 0.0
    %291 = vmatpush1.msra.mxu0 0.0
    %292 = vmatprep.subr.mxu0 0.0
    %293 = vmatpush1.msra.mxu0 0.0
    %294 = vmatprep.subr.mxu0 0.0
    %295 = vmatpush1.msra.mxu0 0.0
    %296 = vmatprep.subr.mxu0 0.0
    %297 = vmatpush1.msra.mxu0 0.0
    %298 = vmatprep.subr.mxu0 0.0
    %299 = vmatpush1.msra.mxu0 0.0
    %300 = vmatprep.subr.mxu0 0.0
    %301 = vmatpush1.msra.mxu0 0.0
    %302 = vmatprep.subr.mxu0 0.0
    %303 = vmatpush1.msra.mxu0 0.0
    %304 = vmatprep.subr.mxu0 0.0
    %305 = vmatpush1.msra.mxu0 0.0
    %306 = vmatprep.subr.mxu0 0.0
    %307 = vmatpush1.msra.mxu0 0.0
    %308 = vmatprep.subr.mxu0 0.0
    %309 = vmatpush1.msra.mxu0 0.0
    %310 = vmatprep.subr.mxu0 0.0
    %311 = vmatpush1.msra.mxu0 0.0
    %312 = vmatprep.subr.mxu0 0.0
    %313 = vmatpush1.msra.mxu0 0.0
    %314 = vmatprep.subr.mxu0 0.0
    %315 = vmatpush1.msra.mxu0 0.0
    %316 = vmatprep.subr.mxu0 0.0
    %317 = vmatpush1.msra.mxu0 0.0
    %318 = vmatprep.mubr.f32.mxu0 0.0
    %319 = vmatmul.mubr.f32.gmra.mrb[0].mxu0 %v229
    %v320 = vpop.f32.mrb[0].mxu0
    %v321 = vadd.f32 %v252, %v320
    %v322 = vpop.f32.mrb[0].mxu0
    %323 = vmatprep.mubr.f32.mxu0 0.0
    %324 = vmatmul.mubr.f32.gmra.mrb[0].mxu0 %v230
    %v325 = vpop.f32.mrb[0].mxu0
    %v326 = vadd.f32 %v252, %v325
    %v327 = vpop.f32.mrb[0].mxu0
    %328 = vdwg.mxu0
    %v329 = vld [vmem:[#allocation3] sm:$0xff]
    %v330 = vld [vmem:[#allocation3 + $0x8] sm:$0xff]
    %v331 = vadd.f32 %v329, %v321
    %v332 = vadd.f32 %v330, %v326
    %333 = vst [vmem:[#allocation9] sm:$0xff] %v331
    %334 = vst [vmem:[#allocation9 + $0x8] sm:$0xff] %v332
    // Predicated region
    $region46: #{tpu_custom_call.1} parent=1 // pred_check
      _
    $region47: #{tpu_custom_call.1} parent=1 // pred_check_branch
      %336 = sbr.rel (0) target = $region49
    $region48: #{tpu_custom_call.1} parent=1 // pred_region
      %s338 = ssub.s32 256, 256
      %339 = vsyncadd [#allocation5], %s338
      %s340 = sshll.u32 [#allocation9], 4
      %s341 = int_to_ptr.vmem [resolvable:$true] %s340
      %346 = dma.vmem_to_hbm [thread:$0]  %s341, 256, %s7, [#allocation5], 128, 128, 8
    $region49: #{tpu_custom_call.1} parent=1 // pred_fallthru
      _
    // Predicated region
    $region50: #{tpu_custom_call.1} parent=1 // pred_check
      _
    $region51: #{tpu_custom_call.1} parent=1 // pred_check_branch
      %348 = sbr.rel (0) target = $region53
    $region52: #{tpu_custom_call.1} parent=1 // pred_region
      %349 = dma.done [#allocation5], 256
    $region53: #{tpu_custom_call.1} parent=1 // pred_fallthru
      _
    %350 = vsyncpa [#allocation4], 1
    %351 = vsyncpa [#allocation7], 1
    %352 = vsyncpa [#allocation5], 1

</llo_original>
